<compile_context>
chip_gen: v7x
topology: tpu7x:2x2x1
jax: 0.10.0
libtpu: 0.0.40
codegen_flags: <defaults>
</compile_context>

<pallas_src>
import jax
import jax.numpy as jnp
from jax.experimental import pallas as pl
from jax.experimental.pallas import tpu as pltpu


def _normalize_kernel(x_ref, s_ref, b_ref, o_ref):
    # x_ref: (TR, TL) lane-dense activation tile.
    # s_ref, b_ref: (TR, 1) per-row (= per (batch, channel)) scale / shift.
    o_ref[...] = (x_ref[...] * s_ref[...] + b_ref[...]).astype(o_ref.dtype)


def normalize_nchw(x, mean, std, *, max_row_tile=256, max_lane_tile=2048):
    """(x - mean) / std with per-channel mean/std; x is NCHW.

    Implemented as y = x * (1/std) + (-mean/std), a single fused VPU
    multiply-add per element, with the per-channel affine folded once on the
    host (O(C) scalars).
    """
    N, C, H, W = x.shape
    R, L = N * C, H * W

    scale = (1.0 / std).astype(x.dtype)           # (C,)
    shift = (-mean / std).astype(x.dtype)         # (C,)
    # Row r of the flattened view corresponds to channel r % C.
    s_rows = jnp.tile(scale, N).reshape(R, 1)     # (N*C, 1) — tiny, hoisted
    b_rows = jnp.tile(shift, N).reshape(R, 1)

    x2 = x.reshape(R, L)                          # contiguous view, no copy

    # Tile picker obeying the (8, 128) rule: a block dim is either the full
    # array extent or a multiple of the quantum that evenly divides it.
    def pick(total, quantum, cap):
        if total <= cap or total % quantum != 0:
            return total
        t = min(cap, total)
        t -= t % quantum
        while total % t != 0:
            t -= quantum
        return t

    TR = pick(R, 8, max_row_tile)
    TL = pick(L, 128, max_lane_tile)
    grid = (R // TR, L // TL)

    y2 = pl.pallas_call(
        _normalize_kernel,
        out_shape=jax.ShapeDtypeStruct((R, L), x.dtype),
        grid=grid,
        in_specs=[
            pl.BlockSpec((TR, TL), lambda i, j: (i, j)),
            pl.BlockSpec((TR, 1), lambda i, j: (i, 0)),
            pl.BlockSpec((TR, 1), lambda i, j: (i, 0)),
        ],
        out_specs=pl.BlockSpec((TR, TL), lambda i, j: (i, j)),
        compiler_params=pltpu.CompilerParams(
            dimension_semantics=("parallel", "parallel")),
    )(x2, s_rows, b_rows)

    return y2.reshape(N, C, H, W)


if __name__ == "__main__":
    key = jax.random.PRNGKey(0)
    kx, km, ks = jax.random.split(key, 3)

    N, C, H, W = 2, 4, 16, 16
    x = jax.random.normal(kx, (N, C, H, W), jnp.float32)
    mean = jax.random.normal(km, (C,), jnp.float32)
    std = jnp.abs(jax.random.normal(ks, (C,), jnp.float32)) + 0.5

    fwd = jax.jit(normalize_nchw)
    out = jax.block_until_ready(fwd(x, mean, std))

    ref = (x - mean.reshape(1, C, 1, 1)) / std.reshape(1, C, 1, 1)
    assert out.shape == (N, C, H, W), out.shape
    assert jnp.all(jnp.isfinite(out))
    assert jnp.allclose(out, ref, rtol=1e-5, atol=1e-5), float(
        jnp.max(jnp.abs(out - ref)))
    print("KERNEL_OK")
</pallas_src>

<mosaic_0001>
module attributes {stable_mosaic.version = 11 : i64} {
  func.func @_normalize_kernel(%arg0: i32, %arg1: i32, %arg2: memref<8x256xf32, #tpu.memory_space<vmem>>, %arg3: memref<8x1xf32, #tpu.memory_space<vmem>>, %arg4: memref<8x1xf32, #tpu.memory_space<vmem>>, %arg5: memref<8x256xf32, #tpu.memory_space<vmem>>) attributes {dimension_semantics = [#tpu.dimension_semantics<parallel>, #tpu.dimension_semantics<parallel>], iteration_bounds = array<i64: 1, 1>, scalar_prefetch = 0 : i64, scratch_operands = 0 : i64, tpu.core_type = #tpu.core_type<tc>, window_params = [{transform_indices = @transform_0, window_bounds = array<i64: 8, 256>}, {transform_indices = @transform_1, window_bounds = array<i64: 8, 1>}, {transform_indices = @transform_2, window_bounds = array<i64: 8, 1>}, {transform_indices = @transform_3, window_bounds = array<i64: 8, 256>}]} {
    %c0 = arith.constant 0 : index
    %c0_0 = arith.constant 0 : index
    %0 = vector.load %arg2[%c0, %c0_0] : memref<8x256xf32, #tpu.memory_space<vmem>>, vector<8x256xf32>
    %c0_1 = arith.constant 0 : index
    %c0_2 = arith.constant 0 : index
    %1 = vector.load %arg3[%c0_1, %c0_2] : memref<8x1xf32, #tpu.memory_space<vmem>>, vector<8x1xf32>
    %2 = vector.broadcast %1 : vector<8x1xf32> to vector<8x256xf32>
    %3 = arith.mulf %0, %2 : vector<8x256xf32>
    %c0_3 = arith.constant 0 : index
    %c0_4 = arith.constant 0 : index
    %4 = vector.load %arg4[%c0_3, %c0_4] : memref<8x1xf32, #tpu.memory_space<vmem>>, vector<8x1xf32>
    %5 = vector.broadcast %4 : vector<8x1xf32> to vector<8x256xf32>
    %6 = arith.addf %3, %5 : vector<8x256xf32>
    %c0_5 = arith.constant 0 : index
    %c0_6 = arith.constant 0 : index
    %7 = vector.load %arg5[%c0_5, %c0_6] : memref<8x256xf32, #tpu.memory_space<vmem>>, vector<8x256xf32>
    tpu.vector_store %arg5[%c0_5, %c0_6], %6 {strides = array<i32>} : memref<8x256xf32, #tpu.memory_space<vmem>>, vector<8x256xf32>,
    return
  }
  func.func @transform_0(%arg0: i32, %arg1: i32) -> (i32, i32) {
    %c0_i32 = arith.constant 0 : i32
    return %arg0, %arg1 : i32, i32
  }
  func.func @transform_1(%arg0: i32, %arg1: i32) -> (i32, i32) {
    %c0_i32 = arith.constant 0 : i32
    %c0_i32_0 = arith.constant 0 : i32
    return %arg0, %c0_i32 : i32, i32
  }
  func.func @transform_2(%arg0: i32, %arg1: i32) -> (i32, i32) {
    %c0_i32 = arith.constant 0 : i32
    %c0_i32_0 = arith.constant 0 : i32
    return %arg0, %c0_i32 : i32, i32
  }
  func.func @transform_3(%arg0: i32, %arg1: i32) -> (i32, i32) {
    %c0_i32 = arith.constant 0 : i32
    return %arg0, %arg1 : i32, i32
  }
}

</mosaic_0001>

<llo_original>
// kernel: tile.18
$region0: #{tile.18}
  #allocation0 [shape = 's32[1]{0}', space=sflag, size = 0x4, scoped, tag = 'scoped memory for tile.18']
  %s0 = inlined_call_operand.vmem [shape: f32[4], index: 0, kind: input, shape index: {}]
  %s1 = inlined_call_operand.vmem [shape: f32[2,4], index: 1, kind: output, shape index: {}]
  // Predicated region
  $region2: #{tile.18} parent=0 // pred_check
    _
  $region3: #{tile.18} parent=0 // pred_check_branch
    %3 = sbr.rel (0) target = $region5
  $region4: #{tile.18} parent=0 // pred_region
    _
  $region5: #{tile.18} parent=0 // pred_fallthru
    _
  %v4 = vld [vmem:[%s0] ss:$0 sm:$0xff]
  %5 = vst [vmem:[%s1] sm:$0x3] %v4

// kernel: tile.0
$region0: #{tile.0}
  %s0 = inlined_call_operand.vmem [shape: f32[2,4], index: 0, kind: input, shape index: {}]
  %s1 = inlined_call_operand.vmem [shape: f32[8,1], index: 1, kind: output, shape index: {}]
  $region1: #{tile.0} parent=0
    #allocation0 [shape = 'u8[4096]{0}', space=vmem, size = 0x1000, scoped, tag = 'scoped mem for input reshape']
    %s3 = sshllo.u32 0, 2
    %v4 = vld [vmem:[%s0] sm:%s3]
    %5 = vst [vmem:[#allocation0] sm:%s3] %v4
    %v6 = vld [vmem:[#allocation0] sm:$0x3]
    %vm7 = vcmask 7168
    %8 = vst.msk [vmem:[%s1] ss:$4 sm:$0x3] %vm7, %v6
    %v9 = vld [vmem:[#allocation0] sm:$0x3]
    %10 = vrot.lane.b32.xlu0 %v9, 127
    %v11 = vpop.permute.xlu0 %10
    %vm12 = vcmask 7168
    %s13 = scalar_lea.vmem %s1, 1
    %14 = vst.msk [vmem:[%s13] ss:$4 sm:$0x3] %vm12, %v11
    %v15 = vld [vmem:[#allocation0] sm:$0x3]
    %16 = vrot.lane.b32.xlu0 %v15, 126
    %v17 = vpop.permute.xlu0 %16
    %vm18 = vcmask 7168
    %s19 = scalar_lea.vmem %s1, 2
    %20 = vst.msk [vmem:[%s19] ss:$4 sm:$0x3] %vm18, %v17
    %v21 = vld [vmem:[#allocation0] sm:$0x3]
    %22 = vrot.lane.b32.xlu0 %v21, 125
    %v23 = vpop.permute.xlu0 %22
    %vm24 = vcmask 7168
    %s25 = scalar_lea.vmem %s1, 3
    %26 = vst.msk [vmem:[%s25] ss:$4 sm:$0x3] %vm24, %v23

// kernel: normalize_nchw.1
$region0: #{normalize_nchw.1}
  #allocation0 [shape = 'u32[]', space=smem, size = 0x4, offset = 0x4, fixed_abs, tag = 'smem constant byte address 0x4 - core index']
  #allocation1 [shape = 'u32[144,128]{1,0:T(1,128)}', space=vmem, size = 0x12000, scoped, tag = 'internal scratch']
  %s0 = inlined_call_operand.vmem [shape: f32[8,256], index: 0, kind: input, shape index: {}]
  %s1 = inlined_call_operand.vmem [shape: f32[8,1], index: 1, kind: input, shape index: {}]
  %s2 = inlined_call_operand.vmem [shape: f32[8,1], index: 2, kind: input, shape index: {}]
  %s3 = inlined_call_operand.vmem [shape: f32[8,256], index: 3, kind: output, shape index: {}]
  %s4 = sld [smem:[#allocation0]]
  $region22: #{normalize_nchw.1} parent=0
    _
  %s6 = ssub.s32 1, %s4
  %s7 = scalar_select 0, %s6, %s4
  // Predicated region
  $region2: #{normalize_nchw.1} parent=0 // pred_check
    _
  $region3: #{normalize_nchw.1} parent=0 // pred_check_branch
    %9 = sbr.rel (0) target = $region5
  $region4: #{normalize_nchw.1} parent=0 // pred_region
    _
  $region5: #{normalize_nchw.1} parent=0 // pred_fallthru
    _
  // Predicated region
  $region6: #{normalize_nchw.1} parent=0 // pred_check
    _
  $region7: #{normalize_nchw.1} parent=0 // pred_check_branch
    %11 = sbr.rel (0) target = $region9
  $region8: #{normalize_nchw.1} parent=0 // pred_region
    _
  $region9: #{normalize_nchw.1} parent=0 // pred_fallthru
    _
  // Predicated region
  $region10: #{normalize_nchw.1} parent=0 // pred_check
    _
  $region11: #{normalize_nchw.1} parent=0 // pred_check_branch
    %13 = sbr.rel (0) target = $region13
  $region12: #{normalize_nchw.1} parent=0 // pred_region
    _
  $region13: #{normalize_nchw.1} parent=0 // pred_fallthru
    _
  %v14 = vld [vmem:[%s0] sm:$0xff]
  %v15 = vld [vmem:[%s0 + $0x8] sm:$0xff]
  %v16 = vld [vmem:[%s1] sm:$0xff]
  %18 = vset.pattern.permute.xlu0 0
  %19 = vperm.xlu0 %18, %v16
  %v20 = vpop.permute.xlu0 %19
  %v22 = vmul.f32 %v14, %v20
  %v23 = vmul.f32 %v15, %v20
  %v24 = vld [vmem:[%s2] sm:$0xff]
  %26 = vset.pattern.permute.xlu0 0
  %27 = vperm.xlu0 %26, %v24
  %v28 = vpop.permute.xlu0 %27
  %v30 = vadd.f32 %v22, %v28
  %v31 = vadd.f32 %v23, %v28
  %32 = vst [vmem:[%s3] sm:$0xff] %v30
  %33 = vst [vmem:[%s3 + $0x8] sm:$0xff] %v31
  // Predicated region
  $region14: #{normalize_nchw.1} parent=0 // pred_check
    _
  $region15: #{normalize_nchw.1} parent=0 // pred_check_branch
    %35 = sbr.rel (0) target = $region17
  $region16: #{normalize_nchw.1} parent=0 // pred_region
    _
  $region17: #{normalize_nchw.1} parent=0 // pred_fallthru
    _
  // Predicated region
  $region18: #{normalize_nchw.1} parent=0 // pred_check
    _
  $region19: #{normalize_nchw.1} parent=0 // pred_check_branch
    %37 = sbr.rel (0) target = $region21
  $region20: #{normalize_nchw.1} parent=0 // pred_region
    _
  $region21: #{normalize_nchw.1} parent=0 // pred_fallthru
    _

</llo_original>
